<compile_context>
chip_gen: v7x
topology: tpu7x:2x2x1
jax: 0.10.0
libtpu: 0.0.40
codegen_flags: <defaults>
</compile_context>

<pallas_src>
import functools

import numpy as np
import jax
import jax.numpy as jnp
from jax import lax
from jax.experimental import pallas as pl
from jax.experimental.pallas import tpu as pltpu


# ---------------------------------------------------------------------------
# Tile / VMEM budgeting
# ---------------------------------------------------------------------------

_TILE_CANDIDATES = (2048, 1024, 512, 256, 128)
_WEIGHT_VMEM_BUDGET = 40 * 1024 * 1024   # 2 planes x 2 bufs, safe on v7x


def _weight_buf_bytes(tb):
    return 2 * 2 * tb * tb * 2           # 2 bf16 planes, double-buffered


def _pick_tile(N, tile_b=None):
    if tile_b is not None:
        if N % tile_b != 0:
            raise ValueError(f"tile_b={tile_b} must divide N={N}")
        return int(tile_b)
    for tb in _TILE_CANDIDATES:
        if N % tb == 0 and _weight_buf_bytes(tb) <= _WEIGHT_VMEM_BUDGET:
            return tb
    if N <= _TILE_CANDIDATES[0]:
        return N                          # tiny problems: one full block
    raise ValueError(
        f"N={N} has no divisor in {_TILE_CANDIDATES}; pad H*W to a multiple "
        "of 128 before calling prepare_r_cal_operator.")


def _vmem_limit_bytes(m2, N, tb):
    wt = _weight_buf_bytes(tb)            # weight double buffers
    ls = 2 * m2 * N * 2                   # VMEM-resident bf16 LHS
    cols = 2 * (4 * m2 + 4) * tb * 4      # column-block ins/outs (generous)
    acc = 2 * m2 * tb * 4                 # f32 accumulators
    total = wt + ls + cols + acc + (8 << 20)
    return int(min(max(total, 32 << 20), 56 << 20))


def _compiler_params(m2, N, tb):
    return pltpu.CompilerParams(
        dimension_semantics=("parallel", "arbitrary"),
        vmem_limit_bytes=_vmem_limit_bytes(m2, N, tb))


# ---------------------------------------------------------------------------
# Kernel bodies
# ---------------------------------------------------------------------------

_DN_T = (((1,), (1,)), ((), ()))          # contract last dims: x @ W.T


def _zero_acc(acc_p, acc_q):
    # NOTE: init/flush keyed on the contraction axis being the LAST grid axis.
    @pl.when(pl.program_id(1) == 0)
    def _():
        acc_p[...] = jnp.zeros_like(acc_p)
        acc_q[...] = jnp.zeros_like(acc_q)


def _ls_tile(ls_ref, tb):
    k = pl.program_id(1)
    return ls_ref[:, pl.ds(pl.multiple_of(k * tb, tb), tb)]


def _adj_mask_kernel(ls_ref, wr_ref, wi_ref, coef_ref, addr_ref, addi_ref,
                     out_ref, acc_p, acc_q, *, nb, tb):
    """out(bf16) = [coef*Re + add_re ; coef*Im + add_im],  (Re,Im) = Ls @ conj(A)."""
    _zero_acc(acc_p, acc_q)
    ls = _ls_tile(ls_ref, tb)
    acc_p[...] += jnp.dot(ls, wr_ref[...], preferred_element_type=jnp.float32)
    acc_q[...] += jnp.dot(ls, wi_ref[...], preferred_element_type=jnp.float32)

    @pl.when(pl.program_id(1) == pl.num_programs(1) - 1)
    def _():
        p = acc_p[...]
        q = acc_q[...]
        coef = coef_ref[...]
        out_ref[:nb, :] = (coef * (p[:nb] - q[nb:])
                           + addr_ref[...]).astype(out_ref.dtype)
        out_ref[nb:, :] = (coef * (q[:nb] + p[nb:])
                           + addi_ref[...]).astype(out_ref.dtype)


def _fwd_dots(ls_ref, wr_ref, wi_ref, acc_p, acc_q, tb):
    """Forward NUFFT via transposed contraction against the conj(A) tiles."""
    _zero_acc(acc_p, acc_q)
    ls = _ls_tile(ls_ref, tb)
    acc_p[...] += lax.dot_general(ls, wr_ref[...], _DN_T,
                                  preferred_element_type=jnp.float32)
    acc_q[...] += lax.dot_general(ls, wi_ref[...], _DN_T,
                                  preferred_element_type=jnp.float32)


def _fwd_abs_kernel(ls_ref, wr_ref, wi_ref, abs_ref, ls2_ref, acc_p, acc_q,
                    *, nb, tb, inv_len):
    """abs = |(Ls @ A.T)/len|  (f32) and the pre-stacked bf16 [abs; 0] LHS."""
    _fwd_dots(ls_ref, wr_ref, wi_ref, acc_p, acc_q, tb)

    @pl.when(pl.program_id(1) == pl.num_programs(1) - 1)
    def _():
        p = acc_p[...]
        q = acc_q[...]
        re = (p[:nb] + q[nb:]) * inv_len
        im = (p[nb:] - q[:nb]) * inv_len
        a = jnp.sqrt(re * re + im * im)
        abs_ref[...] = a
        ls2_ref[:nb, :] = a.astype(ls2_ref.dtype)
        ls2_ref[nb:, :] = jnp.zeros(a.shape, ls2_ref.dtype)


def _fwd_abs_update_kernel(alpha_ref, ls_ref, wr_ref, wi_ref, abs1_ref,
                           ahyabs_ref, df_ref, r_ref, acc_p, acc_q,
                           *, nb, tb, inv_len):
    """abs2 = |(Ls @ A.T)/len|;  DF = abs2 - |Ahy|;  R = abs1 - alpha*DF."""
    _fwd_dots(ls_ref, wr_ref, wi_ref, acc_p, acc_q, tb)

    @pl.when(pl.program_id(1) == pl.num_programs(1) - 1)
    def _():
        p = acc_p[...]
        q = acc_q[...]
        re = (p[:nb] + q[nb:]) * inv_len
        im = (p[nb:] - q[:nb]) * inv_len
        abs2 = jnp.sqrt(re * re + im * im)
        df = abs2 - ahyabs_ref[...]
        df_ref[...] = df
        r_ref[...] = abs1_ref[...] - alpha_ref[0, 0] * df


# ---------------------------------------------------------------------------
# pallas_call wrappers (tiled, pipelined matmul stages)
# ---------------------------------------------------------------------------

def _specs(m2, N, tb):
    nbk = N // tb
    grid = (nbk, nbk)
    # LHS is only (2*nb, N) bf16 -> keep it fully VMEM-resident (one DMA).
    ls_spec = pl.BlockSpec((m2, N), lambda j, k: (0, 0))
    # Pre-blocked weights: one contiguous (tb, tb) tile per DMA.
    w_adj = pl.BlockSpec((None, None, tb, tb), lambda j, k: (k, j, 0, 0))
    w_fwd = pl.BlockSpec((None, None, tb, tb), lambda j, k: (j, k, 0, 0))

    def col(rows):
        return pl.BlockSpec((rows, tb), lambda j, k: (0, j))

    scratch = [pltpu.VMEM((m2, tb), jnp.float32),
               pltpu.VMEM((m2, tb), jnp.float32)]
    return grid, ls_spec, w_adj, w_fwd, col, scratch


def _adj_mask(ls, wr_blk, wi_blk, coef, add_re, add_im, *, nb, tb):
    m2, N = ls.shape
    grid, ls_spec, w_adj, _, col, scratch = _specs(m2, N, tb)
    kern = functools.partial(_adj_mask_kernel, nb=nb, tb=tb)
    return pl.pallas_call(
        kern,
        out_shape=jax.ShapeDtypeStruct((m2, N), jnp.bfloat16),
        grid_spec=pltpu.PrefetchScalarGridSpec(
            num_scalar_prefetch=0,
            grid=grid,
            in_specs=[ls_spec, w_adj, w_adj, col(1), col(1), col(1)],
            out_specs=col(m2),
            scratch_shapes=scratch),
        compiler_params=_compiler_params(m2, N, tb),
    )(ls, wr_blk, wi_blk, coef, add_re, add_im)


def _fwd_abs(ls, wr_blk, wi_blk, *, nb, inv_len, tb):
    m2, N = ls.shape
    grid, ls_spec, _, w_fwd, col, scratch = _specs(m2, N, tb)
    kern = functools.partial(_fwd_abs_kernel, nb=nb, tb=tb, inv_len=inv_len)
    return pl.pallas_call(
        kern,
        out_shape=(jax.ShapeDtypeStruct((nb, N), jnp.float32),
                   jax.ShapeDtypeStruct((m2, N), jnp.bfloat16)),
        grid_spec=pltpu.PrefetchScalarGridSpec(
            num_scalar_prefetch=0,
            grid=grid,
            in_specs=[ls_spec, w_fwd, w_fwd],
            out_specs=(col(nb), col(m2)),
            scratch_shapes=scratch),
        compiler_params=_compiler_params(m2, N, tb),
    )(ls, wr_blk, wi_blk)


def _fwd_abs_update(ls, wr_blk, wi_blk, abs1, ahy_abs, alpha_arr,
                    *, nb, inv_len, tb):
    m2, N = ls.shape
    grid, ls_spec, _, w_fwd, col, scratch = _specs(m2, N, tb)
    alpha_spec = pl.BlockSpec((1, 1), lambda j, k: (0, 0),
                              memory_space=pltpu.MemorySpace.SMEM)
    kern = functools.partial(_fwd_abs_update_kernel, nb=nb, tb=tb,
                             inv_len=inv_len)
    return pl.pallas_call(
        kern,
        out_shape=(jax.ShapeDtypeStruct((nb, N), jnp.float32),
                   jax.ShapeDtypeStruct((nb, N), jnp.float32)),
        grid_spec=pltpu.PrefetchScalarGridSpec(
            num_scalar_prefetch=0,
            grid=grid,
            in_specs=[alpha_spec, ls_spec, w_fwd, w_fwd, col(nb), col(1)],
            out_specs=(col(nb), col(nb)),
            scratch_shapes=scratch),
        compiler_params=_compiler_params(m2, N, tb),
    )(alpha_arr, ls, wr_blk, wi_blk, abs1, ahy_abs)


# ---------------------------------------------------------------------------
# Module-level API
# ---------------------------------------------------------------------------

def _preblock(w, tb):
    """(N, N) -> tile-contiguous (N//tb, N//tb, tb, tb)."""
    N = w.shape[0]
    nbk = N // tb
    return w.reshape(nbk, tb, nbk, tb).transpose(0, 2, 1, 3)


def prepare_r_cal_operator(A, ind, ksp, Ahy, imsize, *, tile_b=None):
    """One-time (module-init style) preparation of operator constants.

    A   : (Nk, N) complex64 exact dense NUFFT matrix (Nk == N = H*W).
    ind : (1, H) {0,1} row-keep indicator.
    ksp : (1, 2, H, W) real/imag planes of the reference k-space.
    Ahy : (1, 2, H, W) real/imag planes of AH(y).
    """
    H, W = imsize
    N = H * W
    tb = _pick_tile(N, tile_b)

    Ar = jnp.real(A).astype(jnp.float32)
    Ai = jnp.imag(A).astype(jnp.float32)

    m = jnp.repeat(ind[0].astype(jnp.float32), W).reshape(1, N)
    one_m = 1.0 - m
    ksp_re = ksp[:, 0].reshape(1, N).astype(jnp.float32)
    ksp_im = ksp[:, 1].reshape(1, N).astype(jnp.float32)
    ahy_re = Ahy[:, 0].reshape(1, N).astype(jnp.float32)
    ahy_im = Ahy[:, 1].reshape(1, N).astype(jnp.float32)

    return dict(
        H=H, W=W, N=N, tb=tb,
        # Two pre-blocked bf16 planes of conj(A); the forward NUFFT reuses
        # them via a transposed contraction, so no A.T copies are stored.
        wahr=_preblock(Ar, tb).astype(jnp.bfloat16),    # real(conj(A)) tiles
        wahi=_preblock(-Ai, tb).astype(jnp.bfloat16),   # imag(conj(A)) tiles
        # branch-1 mask epilogue: m*img + (1-m)*ksp   (rows with ind==0 -> ksp)
        coef1=m, add1_re=one_m * ksp_re, add1_im=one_m * ksp_im,
        # branch-2 mask epilogue: (1-m)*img            (rows with ind==1 -> 0)
        coef2=one_m, zeros_row=jnp.zeros((1, N), jnp.float32),
        ahy_abs=jnp.sqrt(ahy_re * ahy_re + ahy_im * ahy_im),
    )


def r_cal_forward(x, alpha, op):
    """x: (nb, 2, H, W) real/imag channels.  Returns (R, DF_loss, INPUT2), each
    (nb, 2, H, W) with an identically-zero imaginary channel (as in the torch
    module, where abs(.) + 1j*0 makes everything real-valued)."""
    H, W, N, tb = op["H"], op["W"], op["N"], op["tb"]
    nb = x.shape[0]
    inv_len = 1.0 / N

    xr = x[:, 0].reshape(nb, N)
    xi = x[:, 1].reshape(nb, N)
    ls1 = jnp.concatenate([xr, xi], axis=0).astype(jnp.bfloat16)   # [re; im]

    # branch 1: AH(x) -> rows with ind==0 replaced by ksp -> A(.)/len -> |.|
    im1 = _adj_mask(ls1, op["wahr"], op["wahi"],
                    op["coef1"], op["add1_re"], op["add1_im"], nb=nb, tb=tb)
    abs1, ls2 = _fwd_abs(im1, op["wahr"], op["wahi"],
                         nb=nb, inv_len=inv_len, tb=tb)            # == INPUT2

    # branch 2: AH(|.|) -> rows with ind==1 zeroed -> A(.)/len -> |.| -> DF, R
    im2 = _adj_mask(ls2, op["wahr"], op["wahi"],
                    op["coef2"], op["zeros_row"], op["zeros_row"],
                    nb=nb, tb=tb)
    alpha_arr = jnp.full((1, 1), alpha, dtype=jnp.float32)
    df, r = _fwd_abs_update(im2, op["wahr"], op["wahi"],
                            abs1, op["ahy_abs"], alpha_arr,
                            nb=nb, inv_len=inv_len, tb=tb)

    def to_nchw(v):                        # C2R with zero imaginary channel
        re = v.reshape(nb, 1, H, W)
        return jnp.concatenate([re, jnp.zeros_like(re)], axis=1)

    return to_nchw(r), to_nchw(df), to_nchw(abs1)


# ---------------------------------------------------------------------------
# Self-test
# ---------------------------------------------------------------------------

if __name__ == "__main__":
    H = W = 16                # small stand-in for the 256x256 image size
    N = H * W
    nb = 2
    alpha = 0.5

    key = jax.random.PRNGKey(0)
    k1, k2, k3, k4, k5 = jax.random.split(key, 5)

    # Deterministic synthetic non-uniform trajectory + exact dense NUFFT matrix.
    ktraj = jax.random.uniform(k1, (2, N), minval=-jnp.pi, maxval=jnp.pi)
    gy, gx = jnp.meshgrid(jnp.arange(H) - H // 2, jnp.arange(W) - W // 2,
                          indexing="ij")
    coords = jnp.stack([gy.reshape(-1), gx.reshape(-1)], 0).astype(jnp.float32)
    A = jnp.exp(-1j * (ktraj.T @ coords)).astype(jnp.complex64)     # (Nk, N)

    x = jax.random.normal(k2, (nb, 2, H, W), dtype=jnp.float32)
    ksp = jax.random.normal(k3, (1, 2, H, W), dtype=jnp.float32)
    Ahy = jax.random.normal(k4, (1, 2, H, W), dtype=jnp.float32)
    ind = (jax.random.uniform(k5, (1, H)) > 0.5).astype(jnp.int32)

    # Small tile here so the test exercises multi-step grids (j > 1, k > 1).
    op = prepare_r_cal_operator(A, ind, ksp, Ahy, (H, W), tile_b=128)
    R, DF, IN2 = jax.block_until_ready(r_cal_forward(x, alpha, op))

    # ---- float64 references --------------------------------------------
    def f64(a):
        return np.asarray(a).astype(np.float64)

    def qbf16(a):   # bf16 rounding of a real array (what the MXU consumes)
        return f64(jnp.asarray(np.asarray(a, np.float32))
                   .astype(jnp.bfloat16).astype(jnp.float32))

    An = np.asarray(A).astype(np.complex128)
    xr_np = f64(x[:, 0]).reshape(nb, N)
    xi_np = f64(x[:, 1]).reshape(nb, N)
    ksp_re64 = f64(ksp[:, 0]).reshape(1, N)
    ksp_im64 = f64(ksp[:, 1]).reshape(1, N)
    ahy_abs64 = np.abs((f64(Ahy[:, 0]) + 1j * f64(Ahy[:, 1])).reshape(1, N))
    m64 = np.repeat(f64(ind[0]), W)[None, :]

    def run_ref(quant):
        q = qbf16 if quant else (lambda a: np.asarray(a, np.float64))
        wahr, wahi = q(An.real), q(-An.imag)      # conj(A)
        war, wai = q(An.real.T), q(An.imag.T)     # A.T
        # branch 1
        xr_q, xi_q = q(xr_np), q(xi_np)
        i1r = xr_q @ wahr - xi_q @ wahi
        i1i = xr_q @ wahi + xi_q @ wahr
        m1r = m64 * i1r + (1 - m64) * ksp_re64
        m1i = m64 * i1i + (1 - m64) * ksp_im64
        a_r, a_i = q(m1r), q(m1i)
        k1r = (a_r @ war - a_i @ wai) / N
        k1i = (a_r @ wai + a_i @ war) / N
        abs1 = np.sqrt(k1r ** 2 + k1i ** 2)
        # branch 2
        b = q(abs1)
        i2r, i2i = b @ wahr, b @ wahi
        m2r, m2i = (1 - m64) * i2r, (1 - m64) * i2i
        c_r, c_i = q(m2r), q(m2i)
        k2r = (c_r @ war - c_i @ wai) / N
        k2i = (c_r @ wai + c_i @ war) / N
        abs2 = np.sqrt(k2r ** 2 + k2i ** 2)
        df = abs2 - ahy_abs64
        r = abs1 - alpha * df
        return abs1, df, r

    r_out = np.asarray(R[:, 0]).reshape(nb, N)
    df_out = np.asarray(DF[:, 0]).reshape(nb, N)
    in2_out = np.asarray(IN2[:, 0]).reshape(nb, N)

    # (a) tight check against the bf16-operand reference (the math the kernel runs)
    abs1_q, df_q, r_q = run_ref(quant=True)
    np.testing.assert_allclose(in2_out, abs1_q, rtol=1e-2, atol=1e-2)
    np.testing.assert_allclose(df_out, df_q, rtol=1e-2, atol=1e-2)
    np.testing.assert_allclose(r_out, r_q, rtol=1e-2, atol=1e-2)

    # (b) sanity check against the exact (unquantized) float64 module math
    abs1_e, df_e, r_e = run_ref(quant=False)
    np.testing.assert_allclose(in2_out, abs1_e, rtol=5e-2, atol=5e-2)
    np.testing.assert_allclose(df_out, df_e, rtol=5e-2, atol=5e-2)
    np.testing.assert_allclose(r_out, r_e, rtol=5e-2, atol=5e-2)

    assert np.all(np.asarray(R[:, 1]) == 0)
    assert np.all(np.asarray(DF[:, 1]) == 0)
    assert np.all(np.asarray(IN2[:, 1]) == 0)

    print("KERNEL_OK")
</pallas_src>

<mosaic_0001>
module attributes {stable_mosaic.version = 11 : i64} {
  func.func @_adj_mask_kernel(%arg0: i32, %arg1: i32, %arg2: memref<4x256xbf16, #tpu.memory_space<vmem>>, %arg3: memref<1x1x128x128xbf16, #tpu.memory_space<vmem>>, %arg4: memref<1x1x128x128xbf16, #tpu.memory_space<vmem>>, %arg5: memref<1x128xf32, #tpu.memory_space<vmem>>, %arg6: memref<1x128xf32, #tpu.memory_space<vmem>>, %arg7: memref<1x128xf32, #tpu.memory_space<vmem>>, %arg8: memref<4x128xbf16, #tpu.memory_space<vmem>>, %arg9: memref<4x128xf32, #tpu.memory_space<vmem>>, %arg10: memref<4x128xf32, #tpu.memory_space<vmem>>) attributes {dimension_semantics = [#tpu.dimension_semantics<parallel>, #tpu.dimension_semantics<arbitrary>], iteration_bounds = array<i64: 2, 2>, scalar_prefetch = 0 : i64, scratch_operands = 2 : i64, tpu.core_type = #tpu.core_type<tc>, window_params = [{pipeline_mode = #tpu.pipeline_mode<synchronous>, transform_indices = @transform_0, window_bounds = array<i64: 4, 256>}, {transform_indices = @transform_1, window_bounds = array<i64: 1, 1, 128, 128>}, {transform_indices = @transform_2, window_bounds = array<i64: 1, 1, 128, 128>}, {transform_indices = @transform_3, window_bounds = array<i64: 1, 128>}, {transform_indices = @transform_4, window_bounds = array<i64: 1, 128>}, {transform_indices = @transform_5, window_bounds = array<i64: 1, 128>}, {transform_indices = @transform_6, window_bounds = array<i64: 4, 128>}]} {
    %c0_i32 = arith.constant 0 : i32
    %0 = arith.cmpi eq, %arg1, %c0_i32 : i32
    %1 = arith.extui %0 : i1 to i32
    %c0_i32_0 = arith.constant 0 : i32
    %2 = arith.cmpi ne, %1, %c0_i32_0 : i32
    scf.if %2 {
      %cst_19 = arith.constant 0.000000e+00 : f32
      %22 = vector.broadcast %cst_19 : f32 to vector<4x128xf32>
      %c0_20 = arith.constant 0 : index
      %c0_21 = arith.constant 0 : index
      %23 = vector.load %arg9[%c0_20, %c0_21] : memref<4x128xf32, #tpu.memory_space<vmem>>, vector<4x128xf32>
      tpu.vector_store %arg9[%c0_20, %c0_21], %22 {strides = array<i32>} : memref<4x128xf32, #tpu.memory_space<vmem>>, vector<4x128xf32>,
      %cst_22 = arith.constant 0.000000e+00 : f32
      %24 = vector.broadcast %cst_22 : f32 to vector<4x128xf32>
      %c0_23 = arith.constant 0 : index
      %c0_24 = arith.constant 0 : index
      %25 = vector.load %arg10[%c0_23, %c0_24] : memref<4x128xf32, #tpu.memory_space<vmem>>, vector<4x128xf32>
      tpu.vector_store %arg10[%c0_23, %c0_24], %24 {strides = array<i32>} : memref<4x128xf32, #tpu.memory_space<vmem>>, vector<4x128xf32>,
    } else {
    }
    %c128_i32 = arith.constant 128 : i32
    %3 = arith.muli %arg1, %c128_i32 : i32
    %4 = tpu.assume_multiple %3, 128 : i32
    %c0 = arith.constant 0 : index
    %5 = arith.index_cast %4 : i32 to index
    %6 = vector.load %arg2[%c0, %5] : memref<4x256xbf16, #tpu.memory_space<vmem>>, vector<4x128xbf16>
    %c0_1 = arith.constant 0 : index
    %c0_2 = arith.constant 0 : index
    %7 = vector.load %arg9[%c0_1, %c0_2] : memref<4x128xf32, #tpu.memory_space<vmem>>, vector<4x128xf32>
    %c0_3 = arith.constant 0 : index
    %c0_4 = arith.constant 0 : index
    %c0_5 = arith.constant 0 : index
    %c0_6 = arith.constant 0 : index
    %8 = vector.load %arg3[%c0_3, %c0_4, %c0_5, %c0_6] : memref<1x1x128x128xbf16, #tpu.memory_space<vmem>>, vector<1x1x128x128xbf16>
    %9 = vector.shape_cast %8 : vector<1x1x128x128xbf16> to vector<128x128xbf16>
    %cst = arith.constant dense<0.000000e+00> : vector<4x128xf32>
    %10 = tpu.matmul %6, %9, %cst {dimension_numbers = #tpu.dot_dimension_numbers<[1], [0], [0], [1], [0, 0, 1, 1], [], []>} : vector<4x128xbf16>, vector<128x128xbf16>, vector<4x128xf32> -> vector<4x128xf32>
    %11 = arith.addf %7, %10 : vector<4x128xf32>
    %c0_7 = arith.constant 0 : index
    %c0_8 = arith.constant 0 : index
    %12 = vector.load %arg9[%c0_7, %c0_8] : memref<4x128xf32, #tpu.memory_space<vmem>>, vector<4x128xf32>
    tpu.vector_store %arg9[%c0_7, %c0_8], %11 {strides = array<i32>} : memref<4x128xf32, #tpu.memory_space<vmem>>, vector<4x128xf32>,
    %c0_9 = arith.constant 0 : index
    %c0_10 = arith.constant 0 : index
    %13 = vector.load %arg10[%c0_9, %c0_10] : memref<4x128xf32, #tpu.memory_space<vmem>>, vector<4x128xf32>
    %c0_11 = arith.constant 0 : index
    %c0_12 = arith.constant 0 : index
    %c0_13 = arith.constant 0 : index
    %c0_14 = arith.constant 0 : index
    %14 = vector.load %arg4[%c0_11, %c0_12, %c0_13, %c0_14] : memref<1x1x128x128xbf16, #tpu.memory_space<vmem>>, vector<1x1x128x128xbf16>
    %15 = vector.shape_cast %14 : vector<1x1x128x128xbf16> to vector<128x128xbf16>
    %cst_15 = arith.constant dense<0.000000e+00> : vector<4x128xf32>
    %16 = tpu.matmul %6, %15, %cst_15 {dimension_numbers = #tpu.dot_dimension_numbers<[1], [0], [0], [1], [0, 0, 1, 1], [], []>} : vector<4x128xbf16>, vector<128x128xbf16>, vector<4x128xf32> -> vector<4x128xf32>
    %17 = arith.addf %13, %16 : vector<4x128xf32>
    %c0_16 = arith.constant 0 : index
    %c0_17 = arith.constant 0 : index
    %18 = vector.load %arg10[%c0_16, %c0_17] : memref<4x128xf32, #tpu.memory_space<vmem>>, vector<4x128xf32>
    tpu.vector_store %arg10[%c0_16, %c0_17], %17 {strides = array<i32>} : memref<4x128xf32, #tpu.memory_space<vmem>>, vector<4x128xf32>,
    %c1_i32 = arith.constant 1 : i32
    %19 = arith.cmpi eq, %arg1, %c1_i32 : i32
    %20 = arith.extui %19 : i1 to i32
    %c0_i32_18 = arith.constant 0 : i32
    %21 = arith.cmpi ne, %20, %c0_i32_18 : i32
    scf.if %21 {
      %c0_19 = arith.constant 0 : index
      %c0_20 = arith.constant 0 : index
      %22 = vector.load %arg9[%c0_19, %c0_20] : memref<4x128xf32, #tpu.memory_space<vmem>>, vector<4x128xf32>
      %c0_21 = arith.constant 0 : index
      %c0_22 = arith.constant 0 : index
      %23 = vector.load %arg10[%c0_21, %c0_22] : memref<4x128xf32, #tpu.memory_space<vmem>>, vector<4x128xf32>
      %c0_23 = arith.constant 0 : index
      %c0_24 = arith.constant 0 : index
      %24 = vector.load %arg5[%c0_23, %c0_24] : memref<1x128xf32, #tpu.memory_space<vmem>>, vector<1x128xf32>
      %25 = vector.extract_strided_slice %22 {offsets = [0, 0], sizes = [2, 128], strides = [1, 1]} : vector<4x128xf32> to vector<2x128xf32>
      %26 = vector.extract_strided_slice %23 {offsets = [2, 0], sizes = [2, 128], strides = [1, 1]} : vector<4x128xf32> to vector<2x128xf32>
      %27 = arith.subf %25, %26 : vector<2x128xf32>
      %28 = vector.broadcast %24 : vector<1x128xf32> to vector<2x128xf32>
      %29 = arith.mulf %28, %27 : vector<2x128xf32>
      %c0_25 = arith.constant 0 : index
      %c0_26 = arith.constant 0 : index
      %30 = vector.load %arg6[%c0_25, %c0_26] : memref<1x128xf32, #tpu.memory_space<vmem>>, vector<1x128xf32>
      %31 = vector.broadcast %30 : vector<1x128xf32> to vector<2x128xf32>
      %32 = arith.addf %29, %31 : vector<2x128xf32>
      %33 = arith.truncf %32 : vector<2x128xf32> to vector<2x128xbf16>
      %c0_27 = arith.constant 0 : index
      %c0_28 = arith.constant 0 : index
      %34 = vector.load %arg8[%c0_27, %c0_28] : memref<4x128xbf16, #tpu.memory_space<vmem>>, vector<2x128xbf16>
      tpu.vector_store %arg8[%c0_27, %c0_28], %33 {strides = array<i32>} : memref<4x128xbf16, #tpu.memory_space<vmem>>, vector<2x128xbf16>,
      %35 = vector.extract_strided_slice %23 {offsets = [0, 0], sizes = [2, 128], strides = [1, 1]} : vector<4x128xf32> to vector<2x128xf32>
      %36 = vector.extract_strided_slice %22 {offsets = [2, 0], sizes = [2, 128], strides = [1, 1]} : vector<4x128xf32> to vector<2x128xf32>
      %37 = arith.addf %35, %36 : vector<2x128xf32>
      %38 = vector.broadcast %24 : vector<1x128xf32> to vector<2x128xf32>
      %39 = arith.mulf %38, %37 : vector<2x128xf32>
      %c0_29 = arith.constant 0 : index
      %c0_30 = arith.constant 0 : index
      %40 = vector.load %arg7[%c0_29, %c0_30] : memref<1x128xf32, #tpu.memory_space<vmem>>, vector<1x128xf32>
      %41 = vector.broadcast %40 : vector<1x128xf32> to vector<2x128xf32>
      %42 = arith.addf %39, %41 : vector<2x128xf32>
      %43 = arith.truncf %42 : vector<2x128xf32> to vector<2x128xbf16>
      %c2 = arith.constant 2 : index
      %c0_31 = arith.constant 0 : index
      %44 = vector.load %arg8[%c2, %c0_31] : memref<4x128xbf16, #tpu.memory_space<vmem>>, vector<2x128xbf16>
      tpu.vector_store %arg8[%c2, %c0_31], %43 {strides = array<i32>} : memref<4x128xbf16, #tpu.memory_space<vmem>>, vector<2x128xbf16>,
    } else {
    }
    return
  }
  func.func @transform_0(%arg0: i32, %arg1: i32) -> (i32, i32) {
    %c0_i32 = arith.constant 0 : i32
    %c0_i32_0 = arith.constant 0 : i32
    %c0_i32_1 = arith.constant 0 : i32
    return %c0_i32, %c0_i32_0 : i32, i32
  }
  func.func @transform_1(%arg0: i32, %arg1: i32) -> (i32, i32, i32, i32) {
    %c0_i32 = arith.constant 0 : i32
    %c0_i32_0 = arith.constant 0 : i32
    %c0_i32_1 = arith.constant 0 : i32
    return %arg1, %arg0, %c0_i32, %c0_i32_0 : i32, i32, i32, i32
  }
  func.func @transform_2(%arg0: i32, %arg1: i32) -> (i32, i32, i32, i32) {
    %c0_i32 = arith.constant 0 : i32
    %c0_i32_0 = arith.constant 0 : i32
    %c0_i32_1 = arith.constant 0 : i32
    return %arg1, %arg0, %c0_i32, %c0_i32_0 : i32, i32, i32, i32
  }
  func.func @transform_3(%arg0: i32, %arg1: i32) -> (i32, i32) {
    %c0_i32 = arith.constant 0 : i32
    %c0_i32_0 = arith.constant 0 : i32
    return %c0_i32, %arg0 : i32, i32
  }
  func.func @transform_4(%arg0: i32, %arg1: i32) -> (i32, i32) {
    %c0_i32 = arith.constant 0 : i32
    %c0_i32_0 = arith.constant 0 : i32
    return %c0_i32, %arg0 : i32, i32
  }
  func.func @transform_5(%arg0: i32, %arg1: i32) -> (i32, i32) {
    %c0_i32 = arith.constant 0 : i32
    %c0_i32_0 = arith.constant 0 : i32
    return %c0_i32, %arg0 : i32, i32
  }
  func.func @transform_6(%arg0: i32, %arg1: i32) -> (i32, i32) {
    %c0_i32 = arith.constant 0 : i32
    %c0_i32_0 = arith.constant 0 : i32
    return %c0_i32, %arg0 : i32, i32
  }
}

</mosaic_0001>

<llo_original>
// kernel: tpu_custom_call.1
$region0: #{tpu_custom_call.1}
  #allocation0 [shape = 'u32[]', space=smem, size = 0x4, offset = 0x4, fixed_abs, tag = 'smem constant byte address 0x4 - core index']
  #allocation1 [shape = 'u32[144,128]{1,0:T(1,128)}', space=vmem, size = 0x12000, scoped, tag = 'internal scratch']
  #allocation2 [shape = 'f32[4,128]{1,0:T(4,128)}', space=vmem, size = 0x800, scoped, tag = 'scratch operand']
  #allocation3 [shape = 'f32[4,128]{1,0:T(4,128)}', space=vmem, size = 0x800, scoped, tag = 'scratch operand']
  %s0 = inlined_call_operand.hbm [shape: bf16[4,256], index: 0, kind: input, shape index: {}]
  %s1 = inlined_call_operand.hbm [shape: bf16[2,2,128,128], index: 1, kind: input, shape index: {}]
  %s2 = inlined_call_operand.hbm [shape: bf16[2,2,128,128], index: 2, kind: input, shape index: {}]
  %s3 = inlined_call_operand.vmem [shape: f32[1,256], index: 3, kind: input, shape index: {}]
  %s4 = inlined_call_operand.vmem [shape: f32[1,256], index: 4, kind: input, shape index: {}]
  %s5 = inlined_call_operand.vmem [shape: f32[1,256], index: 5, kind: input, shape index: {}]
  %s6 = inlined_call_operand.hbm [shape: bf16[4,256], index: 6, kind: output, shape index: {}]
  %s7 = sld [smem:[#allocation0]]
  $region77: #{tpu_custom_call.1} parent=0
    _
  %s9 = ssub.s32 1, %s7
  %s10 = scalar_select 0, %s9, %s7
  $region1: #{tpu_custom_call.1} parent=0
    #allocation4 [shape = 'u8[2048]{0}', space=vmem, size = 0x800, scoped, tag = 'input window, operand 0, single buffered']
    #allocation5 [shape = 's32[2]{0}', space=sflag, size = 0x8, scoped, tag = 'scoped memory for tpu_custom_call.1']
    #allocation6 [shape = 's32[2]{0}', space=sflag, size = 0x8, scoped, tag = 'scoped memory for tpu_custom_call.1']
    #allocation7 [shape = 'u8[65536]{0}', space=vmem, size = 0x10000, scoped, tag = 'input window, operand 1']
    #allocation8 [shape = 's32[2]{0}', space=sflag, size = 0x8, scoped, tag = 'scoped memory for tpu_custom_call.1']
    #allocation9 [shape = 'u8[65536]{0}', space=vmem, size = 0x10000, scoped, tag = 'input window, operand 2']
    #allocation10 [shape = 'u8[2048]{0}', space=vmem, size = 0x800, scoped, tag = 'output window, operand 0']
    %11 = vsyncpa [#allocation5], 0
    %12 = vsyncpa [#allocation8], 0
    %s13 = scalar_lea.sflag [#allocation8], 1
    %14 = vsyncpa %s13, 0
    %15 = vsyncpa [#allocation6], 0
    %s16 = scalar_lea.sflag [#allocation6], 1
    %17 = vsyncpa %s16, 0
    loop: start=0, step=1, limit=6
    $region2: #{tpu_custom_call.1} parent=1 // loop_pre_header
      _
    $region3: #{tpu_custom_call.1} parent=1 // loop_header
      %s19 = sphi 0, %s23
      %p20 = scmp.ge.s32.totalorder %s19, 6
      %s26 = sphi 0, %s38
      %s27 = sphi 0, %s34
      %s28 = sphi 0, %s26
      %s29 = sphi 0, %s27
      %s30 = sphi 0, %s28
      %s31 = sphi 0, %s29
      %s39 = sphi 0, %s39
      %s41 = sphi 0, %s39
      %s42 = sphi 0, %s41
      %s56 = sphi 0, %s42
      %s64 = sphi 0, %s66
      %s67 = sphi 0, %s64
      %s68 = sphi 0, %s67
      %s84 = sphi 0, %s68
      %s92 = sphi 0, %s94
      %s95 = sphi 0, %s92
      %s96 = sphi 0, %s95
      %s112 = sphi 0, %s96
      %s118 = sphi 0, %s120
      %s121 = sphi 0, %s118
      %s122 = sphi 0, %s121
      %s138 = sphi 0, %s122
      %s144 = sphi 0, %s146
      %s147 = sphi 0, %s144
      %s148 = sphi 0, %s147
      %s164 = sphi 0, %s148
      %s170 = sphi 0, %s172
      %s173 = sphi 0, %s170
      %s174 = sphi 0, %s173
      %s190 = sphi 0, %s174
      %s196 = sphi 0, %s198
      %s199 = sphi 0, %s196
      %s200 = sphi 0, %s199
      %s216 = sphi 0, %s200
    $region4: #{tpu_custom_call.1} parent=1 // loop_header_branch
      %22 = sbr.rel (%p20) target = $region8
    $region5: #{tpu_custom_call.1} parent=1 // loop_body
      %s24 = ssub.s32 %s19, 1
      %s25 = ssub.s32 %s19, 2
      %s32 = sadd.s32 1, %s27
      %p33 = scmp.ge.s32.totalorder %s32, 2
      %s34 = scalar_select %p33, 0, %s32
      %s35 = sadd.s32 1, %s26
      %s36 = scalar_select %p33, %s35, %s26
      %p37 = scmp.ge.s32.totalorder %s36, 2
      %s38 = scalar_select %p37, 0, %s36
      %s40 = sadd.s32 %s39, 1
      %p43 = scmp.eq.s32.totalorder %s19, 3
      %p44 = scmp.ne.s32.totalorder %s39, %s41
      %p45 = scmp.eq.s32.totalorder %s19, 0
      %p46 = por %p44, %p45
      %p47 = scmp.ne.s32.totalorder %s39, %s41
      %p48 = scmp.eq.s32.totalorder %s24, 3
      %p49 = por %p47, %p48
      %p50 = scmp.ne.s32.totalorder %s41, %s42
      %p51 = scmp.eq.s32.totalorder %s24, 0
      %p52 = por %p50, %p51
      %p53 = scmp.ne.s32.totalorder %s41, %s42
      %p54 = scmp.eq.s32.totalorder %s25, 3
      %p55 = por %p53, %p54
      %p57 = scmp.ne.s32.totalorder %s42, %s56
      %p58 = scmp.eq.s32.totalorder %s25, 0
      %p59 = por %p57, %p58
      %s60 = ssub.s32 %s27, %s34
      %s61 = ssub.s32 %s26, %s38
      %s62 = sor.u32 %s60, %s61
      %p63 = scmp.eq.s32.totalorder %s62, 0
      %s65 = sadd.s32 %s64, 1
      %s66 = scalar_select %p63, %s64, %s65
      %p69 = pneg %p63
      %p70 = scmp.eq.s32.totalorder %s19, 3
      %p71 = por %p69, %p70
      %p72 = scmp.ne.s32.totalorder %s64, %s67
      %p73 = scmp.eq.s32.totalorder %s19, 0
      %p74 = por %p72, %p73
      %p75 = scmp.ne.s32.totalorder %s64, %s67
      %p76 = scmp.eq.s32.totalorder %s24, 3
      %p77 = por %p75, %p76
      %p78 = scmp.ne.s32.totalorder %s67, %s68
      %p79 = scmp.eq.s32.totalorder %s24, 0
      %p80 = por %p78, %p79
      %p81 = scmp.ne.s32.totalorder %s67, %s68
      %p82 = scmp.eq.s32.totalorder %s25, 3
      %p83 = por %p81, %p82
      %p85 = scmp.ne.s32.totalorder %s68, %s84
      %p86 = scmp.eq.s32.totalorder %s25, 0
      %p87 = por %p85, %p86
      %s88 = ssub.s32 %s27, %s34
      %s89 = ssub.s32 %s26, %s38
      %s90 = sor.u32 %s88, %s89
      %p91 = scmp.eq.s32.totalorder %s90, 0
      %s93 = sadd.s32 %s92, 1
      %s94 = scalar_select %p91, %s92, %s93
      %p97 = pneg %p91
      %p98 = scmp.eq.s32.totalorder %s19, 3
      %p99 = por %p97, %p98
      %p100 = scmp.ne.s32.totalorder %s92, %s95
      %p101 = scmp.eq.s32.totalorder %s19, 0
      %p102 = por %p100, %p101
      %p103 = scmp.ne.s32.totalorder %s92, %s95
      %p104 = scmp.eq.s32.totalorder %s24, 3
      %p105 = por %p103, %p104
      %p106 = scmp.ne.s32.totalorder %s95, %s96
      %p107 = scmp.eq.s32.totalorder %s24, 0
      %p108 = por %p106, %p107
      %p109 = scmp.ne.s32.totalorder %s95, %s96
      %p110 = scmp.eq.s32.totalorder %s25, 3
      %p111 = por %p109, %p110
      %p113 = scmp.ne.s32.totalorder %s96, %s112
      %p114 = scmp.eq.s32.totalorder %s25, 0
      %p115 = por %p113, %p114
      %s116 = ssub.s32 %s26, %s38
      %p117 = scmp.eq.s32.totalorder %s116, 0
      %s119 = sadd.s32 %s118, 1
      %s120 = scalar_select %p117, %s118, %s119
      %p123 = pneg %p117
      %p124 = scmp.eq.s32.totalorder %s19, 3
      %p125 = por %p123, %p124
      %p126 = scmp.ne.s32.totalorder %s118, %s121
      %p127 = scmp.eq.s32.totalorder %s19, 0
      %p128 = por %p126, %p127
      %p129 = scmp.ne.s32.totalorder %s118, %s121
      %p130 = scmp.eq.s32.totalorder %s24, 3
      %p131 = por %p129, %p130
      %p132 = scmp.ne.s32.totalorder %s121, %s122
      %p133 = scmp.eq.s32.totalorder %s24, 0
      %p134 = por %p132, %p133
      %p135 = scmp.ne.s32.totalorder %s121, %s122
      %p136 = scmp.eq.s32.totalorder %s25, 3
      %p137 = por %p135, %p136
      %p139 = scmp.ne.s32.totalorder %s122, %s138
      %p140 = scmp.eq.s32.totalorder %s25, 0
      %p141 = por %p139, %p140
      %s142 = ssub.s32 %s26, %s38
      %p143 = scmp.eq.s32.totalorder %s142, 0
      %s145 = sadd.s32 %s144, 1
      %s146 = scalar_select %p143, %s144, %s145
      %p149 = pneg %p143
      %p150 = scmp.eq.s32.totalorder %s19, 3
      %p151 = por %p149, %p150
      %p152 = scmp.ne.s32.totalorder %s144, %s147
      %p153 = scmp.eq.s32.totalorder %s19, 0
      %p154 = por %p152, %p153
      %p155 = scmp.ne.s32.totalorder %s144, %s147
      %p156 = scmp.eq.s32.totalorder %s24, 3
      %p157 = por %p155, %p156
      %p158 = scmp.ne.s32.totalorder %s147, %s148
      %p159 = scmp.eq.s32.totalorder %s24, 0
      %p160 = por %p158, %p159
      %p161 = scmp.ne.s32.totalorder %s147, %s148
      %p162 = scmp.eq.s32.totalorder %s25, 3
      %p163 = por %p161, %p162
      %p165 = scmp.ne.s32.totalorder %s148, %s164
      %p166 = scmp.eq.s32.totalorder %s25, 0
      %p167 = por %p165, %p166
      %s168 = ssub.s32 %s26, %s38
      %p169 = scmp.eq.s32.totalorder %s168, 0
      %s171 = sadd.s32 %s170, 1
      %s172 = scalar_select %p169, %s170, %s171
      %p175 = pneg %p169
      %p176 = scmp.eq.s32.totalorder %s19, 3
      %p177 = por %p175, %p176
      %p178 = scmp.ne.s32.totalorder %s170, %s173
      %p179 = scmp.eq.s32.totalorder %s19, 0
      %p180 = por %p178, %p179
      %p181 = scmp.ne.s32.totalorder %s170, %s173
      %p182 = scmp.eq.s32.totalorder %s24, 3
      %p183 = por %p181, %p182
      %p184 = scmp.ne.s32.totalorder %s173, %s174
      %p185 = scmp.eq.s32.totalorder %s24, 0
      %p186 = por %p184, %p185
      %p187 = scmp.ne.s32.totalorder %s173, %s174
      %p188 = scmp.eq.s32.totalorder %s25, 3
      %p189 = por %p187, %p188
      %p191 = scmp.ne.s32.totalorder %s174, %s190
      %p192 = scmp.eq.s32.totalorder %s25, 0
      %p193 = por %p191, %p192
      %s194 = ssub.s32 %s26, %s38
      %p195 = scmp.eq.s32.totalorder %s194, 0
      %s197 = sadd.s32 %s196, 1
      %s198 = scalar_select %p195, %s196, %s197
      %p201 = pneg %p195
      %p202 = scmp.eq.s32.totalorder %s19, 3
      %p203 = por %p201, %p202
      %p204 = scmp.ne.s32.totalorder %s196, %s199
      %p205 = scmp.eq.s32.totalorder %s19, 0
      %p206 = por %p204, %p205
      %p207 = scmp.ne.s32.totalorder %s196, %s199
      %p208 = scmp.eq.s32.totalorder %s24, 3
      %p209 = por %p207, %p208
      %p210 = scmp.ne.s32.totalorder %s199, %s200
      %p211 = scmp.eq.s32.totalorder %s24, 0
      %p212 = por %p210, %p211
      %p213 = scmp.ne.s32.totalorder %s199, %s200
      %p214 = scmp.eq.s32.totalorder %s25, 3
      %p215 = por %p213, %p214
      %p217 = scmp.ne.s32.totalorder %s200, %s216
      %p218 = scmp.eq.s32.totalorder %s25, 0
      %p219 = por %p217, %p218
      %p220 = scmp.le.s32.totalorder 1, %s19
      %p221 = scmp.lt.s32.totalorder %s19, 5
      %p222 = pnand %p220, %p221
      %p223 = pneg %p222
      // Predicated region
      $region9: #{tpu_custom_call.1} parent=5 // pred_check
        _
      $region10: #{tpu_custom_call.1} parent=5 // pred_check_branch
        %225 = sbr.rel (%p222) target = $region12
      $region11: #{tpu_custom_call.1} parent=5 // pred_region
        %s226 = ssub.s32 %s19, 1
        // Predicated region
        $region13: #{tpu_custom_call.1} parent=11 // pred_check
          %p227 = pneg %p52
        $region14: #{tpu_custom_call.1} parent=11 // pred_check_branch
          %229 = sbr.rel (%p227) target = $region16
        $region15: #{tpu_custom_call.1} parent=11 // pred_region
          %s231 = ssub.s32 64, 64
          %232 = vsyncadd [#allocation5], %s231
          %s234 = sshll.u32 [#allocation4], 4
          %s235 = int_to_ptr.vmem [resolvable:$true] %s234
          %237 = dma.hbm_to_vmem [thread:$0]  %s0, 64, %s235, [#allocation5]
        $region16: #{tpu_custom_call.1} parent=11 // pred_fallthru
          _
      $region12: #{tpu_custom_call.1} parent=5 // pred_fallthru
        _
      %p238 = scmp.lt.s32.totalorder %s19, 4
      // Predicated region
      $region17: #{tpu_custom_call.1} parent=5 // pred_check
        %p239 = pneg %p238
      $region18: #{tpu_custom_call.1} parent=5 // pred_check_branch
        %241 = sbr.rel (%p239) target = $region20
      $region19: #{tpu_custom_call.1} parent=5 // pred_region
        // Predicated region
        $region21: #{tpu_custom_call.1} parent=19 // pred_check
          %p242 = pneg %p74
        $region22: #{tpu_custom_call.1} parent=19 // pred_check_branch
          %244 = sbr.rel (%p242) target = $region24
        $region23: #{tpu_custom_call.1} parent=19 // pred_region
          %s245 = sand.u32 %s19, 1
          %s246 = scalar_lea.sflag [#allocation8], %s245
          %s247 = sand.u32 %s64, 1
          %s248 = smul.addr %s247, 64
          %s249 = scalar_lea.vmem [#allocation7], %s248
          %s251 = ssub.s32 1024, 1024
          %252 = vsyncadd %s246, %s251
          %s253 = smul.addr %s26, 16
          %s254 = smul.addr %s27, 32
          %s255 = sadd.s32 %s253, %s254
          %s256 = smul.addr %s255, 64
          %s257 = scalar_lea.hbm %s1, %s256
          %s258 = sshll.u32 %s249, 4
          %s259 = int_to_ptr.vmem [resolvable:$true] %s258
          %264 = dma.hbm_to_vmem [thread:$0]  %s257, 1024, %s259, %s246, 64, 64, 4
        $region24: #{tpu_custom_call.1} parent=19 // pred_fallthru
          _
        // Predicated region
        $region25: #{tpu_custom_call.1} parent=19 // pred_check
          %p265 = pneg %p102
        $region26: #{tpu_custom_call.1} parent=19 // pred_check_branch
          %267 = sbr.rel (%p265) target = $region28
        $region27: #{tpu_custom_call.1} parent=19 // pred_region
          %s268 = sand.u32 %s19, 1
          %s269 = scalar_lea.sflag [#allocation8], %s268
          %s270 = sand.u32 %s92, 1
          %s271 = smul.addr %s270, 64
          %s272 = scalar_lea.vmem [#allocation9], %s271
          %s274 = ssub.s32 1024, 1024
          %275 = vsyncadd %s269, %s274
          %s276 = smul.addr %s26, 16
          %s277 = smul.addr %s27, 32
          %s278 = sadd.s32 %s276, %s277
          %s279 = smul.addr %s278, 64
          %s280 = scalar_lea.hbm %s2, %s279
          %s281 = sshll.u32 %s272, 4
          %s282 = int_to_ptr.vmem [resolvable:$true] %s281
          %287 = dma.hbm_to_vmem [thread:$0]  %s280, 1024, %s282, %s269, 64, 64, 4
        $region28: #{tpu_custom_call.1} parent=19 // pred_fallthru
          _
        // Predicated region
        $region29: #{tpu_custom_call.1} parent=19 // pred_check
          %p288 = pneg %p128
        $region30: #{tpu_custom_call.1} parent=19 // pred_check_branch
          %290 = sbr.rel (%p288) target = $region32
        $region31: #{tpu_custom_call.1} parent=19 // pred_region
          %p291 = scmp.lt.s32.totalorder %s26, 1
          %s292 = scalar_select %p291, %s26, 1
          %s293 = scalar_lea.vmem %s3, %s292
        $region32: #{tpu_custom_call.1} parent=19 // pred_fallthru
          _
        // Predicated region
        $region33: #{tpu_custom_call.1} parent=19 // pred_check
          %p294 = pneg %p154
        $region34: #{tpu_custom_call.1} parent=19 // pred_check_branch
          %296 = sbr.rel (%p294) target = $region36
        $region35: #{tpu_custom_call.1} parent=19 // pred_region
          %p297 = scmp.lt.s32.totalorder %s26, 1
          %s298 = scalar_select %p297, %s26, 1
          %s299 = scalar_lea.vmem %s4, %s298
        $region36: #{tpu_custom_call.1} parent=19 // pred_fallthru
          _
        // Predicated region
        $region37: #{tpu_custom_call.1} parent=19 // pred_check
          %p300 = pneg %p180
        $region38: #{tpu_custom_call.1} parent=19 // pred_check_branch
          %302 = sbr.rel (%p300) target = $region40
        $region39: #{tpu_custom_call.1} parent=19 // pred_region
          %p303 = scmp.lt.s32.totalorder %s26, 1
          %s304 = scalar_select %p303, %s26, 1
          %s305 = scalar_lea.vmem %s5, %s304
        $region40: #{tpu_custom_call.1} parent=19 // pred_fallthru
          _
      $region20: #{tpu_custom_call.1} parent=5 // pred_fallthru
        _
      %p306 = scmp.le.s32.totalorder 1, %s19
      %p307 = scmp.lt.s32.totalorder %s19, 5
      %p308 = pnand %p306, %p307
      %p309 = pneg %p308
      // Predicated region
      $region41: #{tpu_custom_call.1} parent=5 // pred_check
        _
      $region42: #{tpu_custom_call.1} parent=5 // pred_check_branch
        %311 = sbr.rel (%p308) target = $region44
      $region43: #{tpu_custom_call.1} parent=5 // pred_region
        %s312 = ssub.s32 %s19, 1
        // Predicated region
        $region45: #{tpu_custom_call.1} parent=43 // pred_check
          %p313 = pneg %p52
        $region46: #{tpu_custom_call.1} parent=43 // pred_check_branch
          %315 = sbr.rel (%p313) target = $region48
        $region47: #{tpu_custom_call.1} parent=43 // pred_region
          %316 = dma.done [#allocation5], 64
        $region48: #{tpu_custom_call.1} parent=43 // pred_fallthru
          _
        %s317 = sand.u32 %s24, 1
        %s318 = scalar_lea.sflag [#allocation8], %s317
        %s319 = sand.u32 %s67, 1
        %s320 = smul.addr %s319, 64
        %s321 = scalar_lea.vmem [#allocation7], %s320
        // Predicated region
        $region49: #{tpu_custom_call.1} parent=43 // pred_check
          %p322 = pneg %p80
        $region50: #{tpu_custom_call.1} parent=43 // pred_check_branch
          %324 = sbr.rel (%p322) target = $region52
        $region51: #{tpu_custom_call.1} parent=43 // pred_region
          %325 = dma.done %s318, 1024
        $region52: #{tpu_custom_call.1} parent=43 // pred_fallthru
          _
        %s326 = sand.u32 %s24, 1
        %s327 = scalar_lea.sflag [#allocation8], %s326
        %s328 = sand.u32 %s95, 1
        %s329 = smul.addr %s328, 64
        %s330 = scalar_lea.vmem [#allocation9], %s329
        // Predicated region
        $region53: #{tpu_custom_call.1} parent=43 // pred_check
          %p331 = pneg %p108
        $region54: #{tpu_custom_call.1} parent=43 // pred_check_branch
          %333 = sbr.rel (%p331) target = $region56
        $region55: #{tpu_custom_call.1} parent=43 // pred_region
          %334 = dma.done %s327, 1024
        $region56: #{tpu_custom_call.1} parent=43 // pred_fallthru
          _
        %p335 = pneg %p52
        %p336 = pneg %p49
        %s337 = sand.u32 %s24, 1
        %s338 = scalar_lea.sflag [#allocation8], %s337
        %s339 = sand.u32 %s67, 1
        %s340 = smul.addr %s339, 64
        %s341 = scalar_lea.vmem [#allocation7], %s340
        %p342 = pneg %p80
        %p343 = pneg %p77
        %s344 = sand.u32 %s24, 1
        %s345 = scalar_lea.sflag [#allocation8], %s344
        %s346 = sand.u32 %s95, 1
        %s347 = smul.addr %s346, 64
        %s348 = scalar_lea.vmem [#allocation9], %s347
        %p349 = pneg %p108
        %p350 = pneg %p105
        %p351 = scmp.lt.s32.totalorder %s28, 1
        %s352 = scalar_select %p351, %s28, 1
        %s353 = scalar_lea.vmem %s3, %s352
        %p354 = pneg %p134
        %p355 = pneg %p131
        %p356 = scmp.lt.s32.totalorder %s28, 1
        %s357 = scalar_select %p356, %s28, 1
        %s358 = scalar_lea.vmem %s4, %s357
        %p359 = pneg %p160
        %p360 = pneg %p157
        %p361 = scmp.lt.s32.totalorder %s28, 1
        %s362 = scalar_select %p361, %s28, 1
        %s363 = scalar_lea.vmem %s5, %s362
        %p364 = pneg %p186
        %p365 = pneg %p183
        %p366 = pneg %p212
        %p367 = pneg %p209
        %s368 = sand.u32 %s199, 1
        %s369 = scalar_lea.sflag [#allocation6], %s368
        %s370 = sand.u32 %s199, 1
        %s371 = smul.addr %s370, 2
        %s372 = scalar_lea.vmem [#allocation10], %s371
        %p373 = scmp.lt.s32.totalorder %s28, 1
        %s374 = scalar_select %p373, %s28, 1
        %s375 = scalar_lea.vmem %s3, %s374
        %p376 = scmp.lt.s32.totalorder %s28, 1
        %s377 = scalar_select %p376, %s28, 1
        %s378 = scalar_lea.vmem %s4, %s377
        %p379 = scmp.lt.s32.totalorder %s28, 1
        %s380 = scalar_select %p379, %s28, 1
        %s381 = scalar_lea.vmem %s5, %s380
        %p383 = scmp.eq.s32.totalorder %s29, 0
        // Predicated region
        $region57: #{tpu_custom_call.1} parent=43 // pred_check
          %p384 = pneg %p383
        $region58: #{tpu_custom_call.1} parent=43 // pred_check_branch
          %386 = sbr.rel (%p384) target = $region60
        $region59: #{tpu_custom_call.1} parent=43 // pred_region
          %387 = vst [vmem:[#allocation2] sm:$0xf] 0.0
          %388 = vst [vmem:[#allocation3] sm:$0xf] 0.0
        $region60: #{tpu_custom_call.1} parent=43 // pred_fallthru
          _
        %s389 = smul.u32 %s29, 128
        %s390 = sshra.s32 %s389, 7
        %s391 = sand.u32 %s389, 127
        %s392 = smul.addr %s390, 2
        %s393 = scalar_lea.vmem [#allocation4], %s392
        %v394 = vld [vmem:[%s393] sm:$0x3]
        %v395 = vld [vmem:[#allocation2] sm:$0xf]
        %v396 = vld [vmem:[%s321] sm:$0xf]
        %v397 = vld [vmem:[%s321 + $0x4] sm:$0xf]
        %v398 = vld [vmem:[%s321 + $0x8] sm:$0xf]
        %v399 = vld [vmem:[%s321 + $0xc] sm:$0xf]
        %v400 = vld [vmem:[%s321 + $0x10] sm:$0xf]
        %v401 = vld [vmem:[%s321 + $0x14] sm:$0xf]
        %v402 = vld [vmem:[%s321 + $0x18] sm:$0xf]
        %v403 = vld [vmem:[%s321 + $0x1c] sm:$0xf]
        %v404 = vld [vmem:[%s321 + $0x20] sm:$0xf]
        %v405 = vld [vmem:[%s321 + $0x24] sm:$0xf]
        %v406 = vld [vmem:[%s321 + $0x28] sm:$0xf]
        %v407 = vld [vmem:[%s321 + $0x2c] sm:$0xf]
        %v408 = vld [vmem:[%s321 + $0x30] sm:$0xf]
        %v409 = vld [vmem:[%s321 + $0x34] sm:$0xf]
        %v410 = vld [vmem:[%s321 + $0x38] sm:$0xf]
        %v411 = vld [vmem:[%s321 + $0x3c] sm:$0xf]
        %v428 = vunpack.c.l.b16 %v396
        %v429 = vunpack.c.l.b16 %v397
        %v430 = vunpack.c.l.b16 %v398
        %v431 = vunpack.c.l.b16 %v399
        %v432 = vunpack.c.l.b16 %v400
        %v433 = vunpack.c.l.b16 %v401
        %v434 = vunpack.c.l.b16 %v402
        %v435 = vunpack.c.l.b16 %v403
        %v436 = vunpack.c.l.b16 %v404
        %v437 = vunpack.c.l.b16 %v405
        %v438 = vunpack.c.l.b16 %v406
        %v439 = vunpack.c.l.b16 %v407
        %v440 = vunpack.c.l.b16 %v408
        %v441 = vunpack.c.l.b16 %v409
        %v442 = vunpack.c.l.b16 %v410
        %v443 = vunpack.c.l.b16 %v411
        %v444 = vpack.c.b16 %v429, %v428
        %v445 = vpack.c.b16 %v431, %v430
        %v446 = vpack.c.b16 %v433, %v432
        %v447 = vpack.c.b16 %v435, %v434
        %v448 = vpack.c.b16 %v437, %v436
        %v449 = vpack.c.b16 %v439, %v438
        %v450 = vpack.c.b16 %v441, %v440
        %v451 = vpack.c.b16 %v443, %v442
        %460 = vmatprep.subr.bf16.mxu0 0
        %461 = vmatpush1.bf16.msra.mxu0 %v444
        %462 = vmatprep.subr.bf16.mxu0 0
        %463 = vmatpush1.bf16.msra.mxu0 %v445
        %464 = vmatprep.subr.bf16.mxu0 0
        %465 = vmatpush1.bf16.msra.mxu0 %v446
        %466 = vmatprep.subr.bf16.mxu0 0
        %467 = vmatpush1.bf16.msra.mxu0 %v447
        %468 = vmatprep.subr.bf16.mxu0 0
        %469 = vmatpush1.bf16.msra.mxu0 %v448
        %470 = vmatprep.subr.bf16.mxu0 0
        %471 = vmatpush1.bf16.msra.mxu0 %v449
        %472 = vmatprep.subr.bf16.mxu0 0
        %473 = vmatpush1.bf16.msra.mxu0 %v450
        %474 = vmatprep.subr.bf16.mxu0 0
        %475 = vmatpush1.bf16.msra.mxu0 %v451
        %476 = vmatprep.subr.bf16.mxu0 0
        %477 = vmatpush1.bf16.msra.mxu0 0
        %478 = vmatprep.subr.bf16.mxu0 0
        %479 = vmatpush1.bf16.msra.mxu0 0
        %480 = vmatprep.subr.bf16.mxu0 0
        %481 = vmatpush1.bf16.msra.mxu0 0
        %482 = vmatprep.subr.bf16.mxu0 0
        %483 = vmatpush1.bf16.msra.mxu0 0
        %484 = vmatprep.subr.bf16.mxu0 0
        %485 = vmatpush1.bf16.msra.mxu0 0
        %486 = vmatprep.subr.bf16.mxu0 0
        %487 = vmatpush1.bf16.msra.mxu0 0
        %488 = vmatprep.subr.bf16.mxu0 0
        %489 = vmatpush1.bf16.msra.mxu0 0
        %490 = vmatprep.subr.bf16.mxu0 0
        %491 = vmatpush1.bf16.msra.mxu0 0
        %492 = vmatprep.mubr.bf16.mxu0 0
        %493 = vmatmul.mubr.bf16.gmra.mrb[0].mxu0 %v394
        %v494 = vpop.f32.mrb[0].mxu0
        %v495 = vadd.f32 0.0, %v494
        %v496 = vpop.f32.mrb[0].mxu0
        %v497 = vpop.f32.mrb[0].mxu0
        %v498 = vpop.f32.mrb[0].mxu0
        %499 = vdwg.mxu0
        %v500 = vadd.f32 %v395, %v495
        %501 = vst [vmem:[#allocation2] sm:$0xf] %v500
        %v502 = vld [vmem:[#allocation3] sm:$0xf]
        %v503 = vld [vmem:[%s330] sm:$0xf]
        %v504 = vld [vmem:[%s330 + $0x4] sm:$0xf]
        %v505 = vld [vmem:[%s330 + $0x8] sm:$0xf]
        %v506 = vld [vmem:[%s330 + $0xc] sm:$0xf]
        %v507 = vld [vmem:[%s330 + $0x10] sm:$0xf]
        %v508 = vld [vmem:[%s330 + $0x14] sm:$0xf]
        %v509 = vld [vmem:[%s330 + $0x18] sm:$0xf]
        %v510 = vld [vmem:[%s330 + $0x1c] sm:$0xf]
        %v511 = vld [vmem:[%s330 + $0x20] sm:$0xf]
        %v512 = vld [vmem:[%s330 + $0x24] sm:$0xf]
        %v513 = vld [vmem:[%s330 + $0x28] sm:$0xf]
        %v514 = vld [vmem:[%s330 + $0x2c] sm:$0xf]
        %v515 = vld [vmem:[%s330 + $0x30] sm:$0xf]
        %v516 = vld [vmem:[%s330 + $0x34] sm:$0xf]
        %v517 = vld [vmem:[%s330 + $0x38] sm:$0xf]
        %v518 = vld [vmem:[%s330 + $0x3c] sm:$0xf]
        %v535 = vunpack.c.l.b16 %v503
        %v536 = vunpack.c.l.b16 %v504
        %v537 = vunpack.c.l.b16 %v505
        %v538 = vunpack.c.l.b16 %v506
        %v539 = vunpack.c.l.b16 %v507
        %v540 = vunpack.c.l.b16 %v508
        %v541 = vunpack.c.l.b16 %v509
        %v542 = vunpack.c.l.b16 %v510
        %v543 = vunpack.c.l.b16 %v511
        %v544 = vunpack.c.l.b16 %v512
        %v545 = vunpack.c.l.b16 %v513
        %v546 = vunpack.c.l.b16 %v514
        %v547 = vunpack.c.l.b16 %v515
        %v548 = vunpack.c.l.b16 %v516
        %v549 = vunpack.c.l.b16 %v517
        %v550 = vunpack.c.l.b16 %v518
        %v551 = vpack.c.b16 %v536, %v535
        %v552 = vpack.c.b16 %v538, %v537
        %v553 = vpack.c.b16 %v540, %v539
        %v554 = vpack.c.b16 %v542, %v541
        %v555 = vpack.c.b16 %v544, %v543
        %v556 = vpack.c.b16 %v546, %v545
        %v557 = vpack.c.b16 %v548, %v547
        %v558 = vpack.c.b16 %v550, %v549
        %567 = vmatprep.subr.bf16.mxu0 0
        %568 = vmatpush1.bf16.msra.mxu0 %v551
        %569 = vmatprep.subr.bf16.mxu0 0
        %570 = vmatpush1.bf16.msra.mxu0 %v552
        %571 = vmatprep.subr.bf16.mxu0 0
        %572 = vmatpush1.bf16.msra.mxu0 %v553
        %573 = vmatprep.subr.bf16.mxu0 0
        %574 = vmatpush1.bf16.msra.mxu0 %v554
        %575 = vmatprep.subr.bf16.mxu0 0
        %576 = vmatpush1.bf16.msra.mxu0 %v555
        %577 = vmatprep.subr.bf16.mxu0 0
        %578 = vmatpush1.bf16.msra.mxu0 %v556
        %579 = vmatprep.subr.bf16.mxu0 0
        %580 = vmatpush1.bf16.msra.mxu0 %v557
        %581 = vmatprep.subr.bf16.mxu0 0
        %582 = vmatpush1.bf16.msra.mxu0 %v558
        %583 = vmatprep.subr.bf16.mxu0 0
        %584 = vmatpush1.bf16.msra.mxu0 0
        %585 = vmatprep.subr.bf16.mxu0 0
        %586 = vmatpush1.bf16.msra.mxu0 0
        %587 = vmatprep.subr.bf16.mxu0 0
        %588 = vmatpush1.bf16.msra.mxu0 0
        %589 = vmatprep.subr.bf16.mxu0 0
        %590 = vmatpush1.bf16.msra.mxu0 0
        %591 = vmatprep.subr.bf16.mxu0 0
        %592 = vmatpush1.bf16.msra.mxu0 0
        %593 = vmatprep.subr.bf16.mxu0 0
        %594 = vmatpush1.bf16.msra.mxu0 0
        %595 = vmatprep.subr.bf16.mxu0 0
        %596 = vmatpush1.bf16.msra.mxu0 0
        %597 = vmatprep.subr.bf16.mxu0 0
        %598 = vmatpush1.bf16.msra.mxu0 0
        %599 = vmatprep.mubr.bf16.mxu0 0
        %600 = vmatmul.mubr.bf16.gmra.mrb[0].mxu0 %v394
        %v601 = vpop.f32.mrb[0].mxu0
        %v602 = vadd.f32 0.0, %v601
        %v603 = vpop.f32.mrb[0].mxu0
        %v604 = vpop.f32.mrb[0].mxu0
        %v605 = vpop.f32.mrb[0].mxu0
        %606 = vdwg.mxu0
        %v607 = vadd.f32 %v502, %v602
        %608 = vst [vmem:[#allocation3] sm:$0xf] %v607
        %p609 = scmp.eq.s32.totalorder %s29, 1
        // Predicated region
        $region61: #{tpu_custom_call.1} parent=43 // pred_check
          %p610 = pneg %p609
        $region62: #{tpu_custom_call.1} parent=43 // pred_check_branch
          %612 = sbr.rel (%p610) target = $region64
        $region63: #{tpu_custom_call.1} parent=43 // pred_region
          %v613 = vld [vmem:[#allocation2] sm:$0xf]
          %v614 = vld [vmem:[#allocation3] sm:$0xf]
          %v615 = vld [vmem:[%s375] sm:$0x1]
          %v617 = vrot.slane %v614, 2
          %v619 = vsub.f32 %v613, %v617
          %v621 = vlaneseq
          %v622 = vshrl.u32 %v621, 7
          %v623 = vsub.s32 0, %v622
          %v624 = vrot.slane %v615, %v623
          %v626 = vmul.f32 %v624, %v619
          %v627 = vld [vmem:[%s378] sm:$0x1]
          %v629 = vlaneseq
          %v630 = vshrl.u32 %v629, 7
          %v631 = vsub.s32 0, %v630
          %v632 = vrot.slane %v627, %v631
          %v634 = vadd.f32 %v626, %v632
          %v635 = vpack.c.bf16 %v634, %v634
          %636 = vst [vmem:[%s372] sm:$0x1] %v635
          %v638 = vrot.slane %v613, 2
          %v640 = vadd.f32 %v614, %v638
          %v641 = vmul.f32 %v624, %v640
          %v642 = vld [vmem:[%s381] sm:$0x1]
          %v644 = vlaneseq
          %v645 = vshrl.u32 %v644, 7
          %v646 = vsub.s32 0, %v645
          %v647 = vrot.slane %v642, %v646
          %v649 = vadd.f32 %v641, %v647
          %v650 = vpack.c.bf16 %v649, %v649
          %v653 = vunpack.c.l.s4 1983009808
          %v654 = vunpack.c.0.s8 %v653
          %v655 = vlaneseq
          %v656 = vshrl.u32 %v655, 7
          %v657 = vsub.s32 %v654, %v656
          %v658 = vrot.slane %v650, %v657
          %v659 = vrot.slane %v658, 7
          %661 = vst [vmem:[%s372] sm:$0x2] %v659
        $region64: #{tpu_custom_call.1} parent=43 // pred_fallthru
          _
        %s662 = sand.u32 %s199, 1
        %s663 = scalar_lea.sflag [#allocation6], %s662
        %s664 = sand.u32 %s199, 1
        %s665 = smul.addr %s664, 2
        %s666 = scalar_lea.vmem [#allocation10], %s665
        // Predicated region
        $region65: #{tpu_custom_call.1} parent=43 // pred_check
          %p667 = pneg %p209
        $region66: #{tpu_custom_call.1} parent=43 // pred_check_branch
          %669 = sbr.rel (%p667) target = $region68
        $region67: #{tpu_custom_call.1} parent=43 // pred_region
          %s671 = ssub.s32 32, 32
          %672 = vsyncadd %s663, %s671
          %s673 = smul.addr %s28, 32
          %s674 = scalar_lea.hbm %s6, %s673
          %s676 = sshll.u32 %s666, 4
          %s677 = int_to_ptr.vmem [resolvable:$true] %s676
          %679 = dma.vmem_to_hbm [thread:$0]  %s677, 32, %s674, %s663
        $region68: #{tpu_custom_call.1} parent=43 // pred_fallthru
          _
      $region44: #{tpu_custom_call.1} parent=5 // pred_fallthru
        _
      %p680 = scmp.le.s32.totalorder 2, %s19
      // Predicated region
      $region69: #{tpu_custom_call.1} parent=5 // pred_check
        %p681 = pneg %p680
      $region70: #{tpu_custom_call.1} parent=5 // pred_check_branch
        %683 = sbr.rel (%p681) target = $region72
      $region71: #{tpu_custom_call.1} parent=5 // pred_region
        %s684 = ssub.s32 %s19, 2
        // Predicated region
        $region73: #{tpu_custom_call.1} parent=71 // pred_check
          %p685 = pneg %p215
        $region74: #{tpu_custom_call.1} parent=71 // pred_check_branch
          %687 = sbr.rel (%p685) target = $region76
        $region75: #{tpu_custom_call.1} parent=71 // pred_region
          %s688 = sand.u32 %s200, 1
          %s689 = scalar_lea.sflag [#allocation6], %s688
          %s690 = sand.u32 %s200, 1
          %s691 = smul.addr %s690, 2
          %s692 = scalar_lea.vmem [#allocation10], %s691
          %693 = dma.done %s689, 32
        $region76: #{tpu_custom_call.1} parent=71 // pred_fallthru
          _
      $region72: #{tpu_custom_call.1} parent=5 // pred_fallthru
        _
    $region6: #{tpu_custom_call.1} parent=1 // loop_footer
      %s23 = sadd.s32 1, %s19
    $region7: #{tpu_custom_call.1} parent=1 // loop_footer_branch
      %18 = sbr.rel target = $region3
    $region8: #{tpu_custom_call.1} parent=1 // loop_exit
      _
    %694 = vsyncpa [#allocation5], 1
    %s695 = scalar_lea.sflag [#allocation5], 1
    %696 = vsyncpa %s695, 1
    %697 = vsyncpa [#allocation8], 1
    %s698 = scalar_lea.sflag [#allocation8], 1
    %699 = vsyncpa %s698, 1
    %700 = vsyncpa [#allocation6], 1
    %s701 = scalar_lea.sflag [#allocation6], 1
    %702 = vsyncpa %s701, 1

</llo_original>
